<compile_context>
chip_gen: v6e
topology: v6e:2x2x1
jax: 0.10.0
libtpu: 0.0.40
codegen_flags: <defaults>
</compile_context>

<pallas_src>
import functools

import jax
import jax.numpy as jnp
from jax.experimental import pallas as pl
from jax.experimental.pallas import tpu as pltpu


# ----------------------------- kernels --------------------------------------

def _xw_kernel(x_ref, w1_ref, xw_ref):
    # XW1 tile = X_tile @ W1, f32 accumulation on the MXU.
    xw = jnp.dot(x_ref[...], w1_ref[...], preferred_element_type=jnp.float32)
    xw_ref[...] = xw.astype(xw_ref.dtype)


def _hidden_kernel(a1_ref, xw_ref, b1_ref, w2_ref, hw_ref):
    # h1 tile = relu(A1_tile @ XW1 + b1)   (layer 1)
    h1 = jnp.dot(a1_ref[...], xw_ref[...], preferred_element_type=jnp.float32)
    h1 = jnp.maximum(h1 + b1_ref[...], 0.0)
    # dropout: identity (eval mode)
    # HW2 tile = h1_tile @ W2              (layer 2, pre-aggregation)
    hw = jnp.dot(h1.astype(w2_ref.dtype), w2_ref[...],
                 preferred_element_type=jnp.float32)
    hw_ref[...] = hw.astype(hw_ref.dtype)


def _out_kernel(a2_ref, hw_ref, b2_ref, out_ref, *, num_classes):
    # h2 tile = relu(A2_tile @ HW2 + b2)
    h2 = jnp.dot(a2_ref[...], hw_ref[...], preferred_element_type=jnp.float32)
    h2 = jnp.maximum(h2 + b2_ref[...], 0.0)

    # Mask padded class columns so log_softmax normalizes only over real classes.
    col = jax.lax.broadcasted_iota(jnp.int32, h2.shape, 1)
    h2 = jnp.where(col < num_classes, h2, -1e30)

    # log_softmax over dim=1 (f32 epilogue on VPU/XLU/EUP).
    m = jnp.max(h2, axis=1, keepdims=True)
    z = h2 - m
    lse = jnp.log(jnp.sum(jnp.exp(z), axis=1, keepdims=True))
    out_ref[...] = (z - lse).astype(out_ref.dtype)


# ----------------------------- wrapper ---------------------------------------

def _round_up(n, m):
    return ((n + m - 1) // m) * m


def _pad_to(arr, shape):
    pads = [(0, t - s) for s, t in zip(arr.shape, shape)]
    return jnp.pad(arr, pads)


def gcn_forward(a1, x, w1, b1, a2, w2, b2, *, row_tile=128,
                matmul_dtype=jnp.float32):
    """2-layer GCN forward via three row-tiled Pallas kernels.

    a1: [n_mid, n_src]  normalized block-0 adjacency
    x : [n_src, in_feats]
    w1: [in_feats, h_feats],  b1: [1, h_feats]
    a2: [n_dst, n_mid]  normalized block-1 adjacency
    w2: [h_feats, num_classes], b2: [1, num_classes]
    returns [n_dst, num_classes] log-probabilities (float32).
    """
    n_mid, n_src = a1.shape
    n_dst, _ = a2.shape
    in_feats = x.shape[1]
    h_feats = w1.shape[1]
    num_classes = w2.shape[1]

    # --- padded (lane-dense / sublane-clean) sizes ---------------------------
    fin_p = _round_up(in_feats, 128)
    fh_p = _round_up(h_feats, 128)
    fc_p = _round_up(num_classes, 128)
    n_src_p = _round_up(n_src, row_tile)
    n_mid_p = _round_up(n_mid, row_tile)
    n_dst_p = _round_up(n_dst, row_tile)

    # --- pad + cast host-side (zero padding is exact for this computation) ---
    x_p = _pad_to(x, (n_src_p, fin_p)).astype(matmul_dtype)
    a1_p = _pad_to(a1, (n_mid_p, n_src_p)).astype(matmul_dtype)
    a2_p = _pad_to(a2, (n_dst_p, n_mid_p)).astype(matmul_dtype)
    w1_p = _pad_to(w1, (fin_p, fh_p)).astype(matmul_dtype)
    w2_p = _pad_to(w2, (fh_p, fc_p)).astype(matmul_dtype)
    b1_p = _pad_to(b1, (1, fh_p)).astype(jnp.float32)
    b2_p = _pad_to(b2, (1, fc_p)).astype(jnp.float32)

    cparams = pltpu.CompilerParams(dimension_semantics=("parallel",))

    # --- K1: XW1 = X @ W1  (tiled over source-node rows) ---------------------
    xw = pl.pallas_call(
        _xw_kernel,
        out_shape=jax.ShapeDtypeStruct((n_src_p, fh_p), matmul_dtype),
        grid=(n_src_p // row_tile,),
        in_specs=[pl.BlockSpec((row_tile, fin_p), lambda i: (i, 0)),
                  pl.BlockSpec((fin_p, fh_p), lambda i: (0, 0))],
        out_specs=pl.BlockSpec((row_tile, fh_p), lambda i: (i, 0)),
        compiler_params=cparams,
    )(x_p, w1_p)

    # --- K2: HW2 = relu(A1 @ XW1 + b1) @ W2  (tiled over mid-node rows) ------
    hw = pl.pallas_call(
        _hidden_kernel,
        out_shape=jax.ShapeDtypeStruct((n_mid_p, fc_p), matmul_dtype),
        grid=(n_mid_p // row_tile,),
        in_specs=[pl.BlockSpec((row_tile, n_src_p), lambda i: (i, 0)),
                  pl.BlockSpec((n_src_p, fh_p), lambda i: (0, 0)),
                  pl.BlockSpec((1, fh_p), lambda i: (0, 0)),
                  pl.BlockSpec((fh_p, fc_p), lambda i: (0, 0))],
        out_specs=pl.BlockSpec((row_tile, fc_p), lambda i: (i, 0)),
        compiler_params=cparams,
    )(a1_p, xw, b1_p, w2_p)

    # --- K3: out = log_softmax(relu(A2 @ HW2 + b2))  (tiled over dst rows) ---
    out_p = pl.pallas_call(
        functools.partial(_out_kernel, num_classes=num_classes),
        out_shape=jax.ShapeDtypeStruct((n_dst_p, fc_p), jnp.float32),
        grid=(n_dst_p // row_tile,),
        in_specs=[pl.BlockSpec((row_tile, n_mid_p), lambda i: (i, 0)),
                  pl.BlockSpec((n_mid_p, fc_p), lambda i: (0, 0)),
                  pl.BlockSpec((1, fc_p), lambda i: (0, 0))],
        out_specs=pl.BlockSpec((row_tile, fc_p), lambda i: (i, 0)),
        compiler_params=cparams,
    )(a2_p, hw, b2_p)

    # slice off node/class padding
    return out_p[:n_dst, :num_classes]


# ----------------------------- reference & test ------------------------------

def _reference(a1, x, w1, b1, a2, w2, b2):
    h1 = jnp.maximum(a1 @ (x @ w1) + b1, 0.0)
    h2 = jnp.maximum(a2 @ (h1 @ w2) + b2, 0.0)
    return jax.nn.log_softmax(h2, axis=1)


if __name__ == "__main__":
    # small shapes consistent with the module:
    in_feats, h_feats, num_classes = 32, 16, 8
    n_src, n_mid, n_dst = 16, 12, 8        # blocks[0]: n_mid x n_src, blocks[1]: n_dst x n_mid

    key = jax.random.PRNGKey(0)
    k_x, k_a1, k_a2, k_w1, k_w2 = jax.random.split(key, 5)

    # node features for the outermost (source) nodes
    x = jax.random.normal(k_x, (n_src, in_feats), dtype=jnp.float32)

    # deterministic dense "blocks": random bipartite adjacency, symmetric-normalized
    def make_block(k, n_out, n_in):
        raw = (jax.random.uniform(k, (n_out, n_in)) < 0.4).astype(jnp.float32)
        raw = raw + jnp.eye(n_out, n_in, dtype=jnp.float32)  # ensure nonzero row degrees
        d_out = jnp.clip(raw.sum(axis=1, keepdims=True), 1.0)
        d_in = jnp.clip(raw.sum(axis=0, keepdims=True), 1.0)
        return raw / jnp.sqrt(d_out) / jnp.sqrt(d_in)

    a1 = make_block(k_a1, n_mid, n_src)    # blocks[0]
    a2 = make_block(k_a2, n_dst, n_mid)    # blocks[1]

    # deterministic Glorot-uniform-ish weights (GraphConv default init)
    def glorot(k, fan_in, fan_out):
        lim = jnp.sqrt(6.0 / (fan_in + fan_out))
        return jax.random.uniform(k, (fan_in, fan_out), minval=-lim, maxval=lim,
                                  dtype=jnp.float32)

    w1 = glorot(k_w1, in_feats, h_feats)
    b1 = jnp.zeros((1, h_feats), dtype=jnp.float32)
    w2 = glorot(k_w2, h_feats, num_classes)
    b2 = jnp.zeros((1, num_classes), dtype=jnp.float32)

    ref = _reference(a1, x, w1, b1, a2, w2, b2)

    # exact-precision path (f32 MXU operands), row_tile=8 exercises a multi-step grid
    out = gcn_forward(a1, x, w1, b1, a2, w2, b2,
                      row_tile=8, matmul_dtype=jnp.float32)
    out = jax.block_until_ready(out)
    assert out.shape == (n_dst, num_classes)
    assert jnp.allclose(out, ref, atol=1e-5, rtol=1e-5), "f32 mismatch vs reference"

    # bf16 MXU-operand path (f32 accumulation / epilogue) -- perf path at scale
    out_bf16 = gcn_forward(a1, x, w1, b1, a2, w2, b2,
                           row_tile=8, matmul_dtype=jnp.bfloat16)
    out_bf16 = jax.block_until_ready(out_bf16)
    assert out_bf16.shape == (n_dst, num_classes)
    assert jnp.allclose(out_bf16, ref, atol=1e-1, rtol=1e-1), "bf16 mismatch vs reference"

    print("KERNEL_OK")
</pallas_src>

<mosaic_0001>
module attributes {stable_mosaic.version = 11 : i64} {
  func.func @_xw_kernel(%arg0: i32, %arg1: memref<8x128xf32, #tpu.memory_space<vmem>>, %arg2: memref<128x128xf32, #tpu.memory_space<vmem>>, %arg3: memref<8x128xf32, #tpu.memory_space<vmem>>) attributes {dimension_semantics = [#tpu.dimension_semantics<parallel>], iteration_bounds = array<i64: 2>, scalar_prefetch = 0 : i64, scratch_operands = 0 : i64, tpu.core_type = #tpu.core_type<tc>, window_params = [{transform_indices = @transform_0, window_bounds = array<i64: 8, 128>}, {pipeline_mode = #tpu.pipeline_mode<synchronous>, transform_indices = @transform_1, window_bounds = array<i64: 128, 128>}, {transform_indices = @transform_2, window_bounds = array<i64: 8, 128>}]} {
    %c0 = arith.constant 0 : index
    %c0_0 = arith.constant 0 : index
    %0 = vector.load %arg1[%c0, %c0_0] : memref<8x128xf32, #tpu.memory_space<vmem>>, vector<8x128xf32>
    %c0_1 = arith.constant 0 : index
    %c0_2 = arith.constant 0 : index
    %1 = vector.load %arg2[%c0_1, %c0_2] : memref<128x128xf32, #tpu.memory_space<vmem>>, vector<128x128xf32>
    %cst = arith.constant dense<0.000000e+00> : vector<8x128xf32>
    %2 = tpu.matmul %0, %1, %cst {dimension_numbers = #tpu.dot_dimension_numbers<[1], [0], [0], [1], [0, 0, 1, 1], [], []>} : vector<8x128xf32>, vector<128x128xf32>, vector<8x128xf32> -> vector<8x128xf32>
    %c0_3 = arith.constant 0 : index
    %c0_4 = arith.constant 0 : index
    %3 = vector.load %arg3[%c0_3, %c0_4] : memref<8x128xf32, #tpu.memory_space<vmem>>, vector<8x128xf32>
    tpu.vector_store %arg3[%c0_3, %c0_4], %2 {strides = array<i32>} : memref<8x128xf32, #tpu.memory_space<vmem>>, vector<8x128xf32>,
    return
  }
  func.func @transform_0(%arg0: i32) -> (i32, i32) {
    %c0_i32 = arith.constant 0 : i32
    %c0_i32_0 = arith.constant 0 : i32
    return %arg0, %c0_i32 : i32, i32
  }
  func.func @transform_1(%arg0: i32) -> (i32, i32) {
    %c0_i32 = arith.constant 0 : i32
    %c0_i32_0 = arith.constant 0 : i32
    %c0_i32_1 = arith.constant 0 : i32
    return %c0_i32, %c0_i32_0 : i32, i32
  }
  func.func @transform_2(%arg0: i32) -> (i32, i32) {
    %c0_i32 = arith.constant 0 : i32
    %c0_i32_0 = arith.constant 0 : i32
    return %arg0, %c0_i32 : i32, i32
  }
}

</mosaic_0001>

<llo_original>
// kernel: tpu_custom_call.1
$region0: #{tpu_custom_call.1}
  #allocation0 [shape = 'u32[]', space=smem, size = 0x4, offset = 0x4, fixed_abs, tag = 'smem constant byte address 0x4 - core index']
  #allocation1 [shape = 'u32[144,128]{1,0:T(1,128)}', space=vmem, size = 0x12000, scoped, tag = 'internal scratch']
  %s0 = inlined_call_operand.hbm [shape: f32[16,128], index: 0, kind: input, shape index: {}]
  %s1 = inlined_call_operand.hbm [shape: f32[128,128], index: 1, kind: input, shape index: {}]
  %s2 = inlined_call_operand.hbm [shape: f32[16,128], index: 2, kind: output, shape index: {}]
  %s3 = sld [smem:[#allocation0]]
  $region49: #{tpu_custom_call.1} parent=0
    _
  %s5 = ssub.s32 1, %s3
  %s6 = scalar_select 0, %s5, %s3
  $region1: #{tpu_custom_call.1} parent=0
    #allocation2 [shape = 'u8[8192]{0}', space=vmem, size = 0x2000, scoped, tag = 'input window, operand 0']
    #allocation3 [shape = 's32[2]{0}', space=sflag, size = 0x8, scoped, tag = 'scoped memory for tpu_custom_call.1']
    #allocation4 [shape = 's32[2]{0}', space=sflag, size = 0x8, scoped, tag = 'scoped memory for tpu_custom_call.1']
    #allocation5 [shape = 'u8[65536]{0}', space=vmem, size = 0x10000, scoped, tag = 'input window, operand 1, single buffered']
    #allocation6 [shape = 's32[1]{0}', space=sflag, size = 0x4, scoped, tag = 'scoped memory for tpu_custom_call.1']
    #allocation7 [shape = 'u8[8192]{0}', space=vmem, size = 0x2000, scoped, tag = 'output window, operand 0']
    %7 = vsyncpa [#allocation3], 0
    %s8 = scalar_lea.sflag [#allocation3], 1
    %9 = vsyncpa %s8, 0
    %10 = vsyncpa [#allocation6], 0
    %11 = vsyncpa [#allocation4], 0
    %s12 = scalar_lea.sflag [#allocation4], 1
    %13 = vsyncpa %s12, 0
    loop: start=0, step=1, limit=4
    $region2: #{tpu_custom_call.1} parent=1 // loop_pre_header
      _
    $region3: #{tpu_custom_call.1} parent=1 // loop_header
      %s15 = sphi 0, %s19
      %p16 = scmp.ge.s32.totalorder %s15, 4
      %s25 = sphi 0, %s27
      %s28 = sphi 0, %s25
      %s29 = sphi 0, %s28
      %s45 = sphi 0, %s29
      %s49 = sphi 0, %s49
      %s51 = sphi 0, %s49
      %s52 = sphi 0, %s51
      %s66 = sphi 0, %s52
      %s72 = sphi 0, %s74
      %s75 = sphi 0, %s72
      %s76 = sphi 0, %s75
      %s92 = sphi 0, %s76
    $region4: #{tpu_custom_call.1} parent=1 // loop_header_branch
      %18 = sbr.rel (%p16) target = $region8
    $region5: #{tpu_custom_call.1} parent=1 // loop_body
      %s20 = ssub.s32 %s15, 1
      %s21 = ssub.s32 %s15, 2
      %s22 = sadd.s32 %s15, 1
      %s23 = ssub.s32 %s15, %s22
      %p24 = scmp.eq.s32.totalorder %s23, 0
      %s26 = sadd.s32 %s25, 1
      %s27 = scalar_select %p24, %s25, %s26
      %p30 = pneg %p24
      %p31 = scmp.eq.s32.totalorder %s15, 1
      %p32 = por %p30, %p31
      %p33 = scmp.ne.s32.totalorder %s25, %s28
      %p34 = scmp.eq.s32.totalorder %s15, 0
      %p35 = por %p33, %p34
      %p36 = scmp.ne.s32.totalorder %s25, %s28
      %p37 = scmp.eq.s32.totalorder %s20, 1
      %p38 = por %p36, %p37
      %p39 = scmp.ne.s32.totalorder %s28, %s29
      %p40 = scmp.eq.s32.totalorder %s20, 0
      %p41 = por %p39, %p40
      %p42 = scmp.ne.s32.totalorder %s28, %s29
      %p43 = scmp.eq.s32.totalorder %s21, 1
      %p44 = por %p42, %p43
      %p46 = scmp.ne.s32.totalorder %s29, %s45
      %p47 = scmp.eq.s32.totalorder %s21, 0
      %p48 = por %p46, %p47
      %s50 = sadd.s32 %s49, 1
      %p53 = scmp.eq.s32.totalorder %s15, 1
      %p54 = scmp.ne.s32.totalorder %s49, %s51
      %p55 = scmp.eq.s32.totalorder %s15, 0
      %p56 = por %p54, %p55
      %p57 = scmp.ne.s32.totalorder %s49, %s51
      %p58 = scmp.eq.s32.totalorder %s20, 1
      %p59 = por %p57, %p58
      %p60 = scmp.ne.s32.totalorder %s51, %s52
      %p61 = scmp.eq.s32.totalorder %s20, 0
      %p62 = por %p60, %p61
      %p63 = scmp.ne.s32.totalorder %s51, %s52
      %p64 = scmp.eq.s32.totalorder %s21, 1
      %p65 = por %p63, %p64
      %p67 = scmp.ne.s32.totalorder %s52, %s66
      %p68 = scmp.eq.s32.totalorder %s21, 0
      %p69 = por %p67, %p68
      %s70 = ssub.s32 %s15, %s22
      %p71 = scmp.eq.s32.totalorder %s70, 0
      %s73 = sadd.s32 %s72, 1
      %s74 = scalar_select %p71, %s72, %s73
      %p77 = pneg %p71
      %p78 = scmp.eq.s32.totalorder %s15, 1
      %p79 = por %p77, %p78
      %p80 = scmp.ne.s32.totalorder %s72, %s75
      %p81 = scmp.eq.s32.totalorder %s15, 0
      %p82 = por %p80, %p81
      %p83 = scmp.ne.s32.totalorder %s72, %s75
      %p84 = scmp.eq.s32.totalorder %s20, 1
      %p85 = por %p83, %p84
      %p86 = scmp.ne.s32.totalorder %s75, %s76
      %p87 = scmp.eq.s32.totalorder %s20, 0
      %p88 = por %p86, %p87
      %p89 = scmp.ne.s32.totalorder %s75, %s76
      %p90 = scmp.eq.s32.totalorder %s21, 1
      %p91 = por %p89, %p90
      %p93 = scmp.ne.s32.totalorder %s76, %s92
      %p94 = scmp.eq.s32.totalorder %s21, 0
      %p95 = por %p93, %p94
      %p96 = scmp.le.s32.totalorder 1, %s15
      %p97 = scmp.lt.s32.totalorder %s15, 3
      %p98 = pnand %p96, %p97
      %p99 = pneg %p98
      // Predicated region
      $region9: #{tpu_custom_call.1} parent=5 // pred_check
        _
      $region10: #{tpu_custom_call.1} parent=5 // pred_check_branch
        %101 = sbr.rel (%p98) target = $region12
      $region11: #{tpu_custom_call.1} parent=5 // pred_region
        %s102 = ssub.s32 %s15, 1
        // Predicated region
        $region13: #{tpu_custom_call.1} parent=11 // pred_check
          %p103 = pneg %p62
        $region14: #{tpu_custom_call.1} parent=11 // pred_check_branch
          %105 = sbr.rel (%p103) target = $region16
        $region15: #{tpu_custom_call.1} parent=11 // pred_region
          %s107 = ssub.s32 2048, 2048
          %108 = vsyncadd [#allocation6], %s107
          %s109 = sshll.u32 [#allocation5], 4
          %s110 = int_to_ptr.vmem [resolvable:$true] %s109
          %115 = dma.hbm_to_vmem [thread:$0]  %s1, 2048, %s110, [#allocation6], 128, 128, 8
        $region16: #{tpu_custom_call.1} parent=11 // pred_fallthru
          _
      $region12: #{tpu_custom_call.1} parent=5 // pred_fallthru
        _
      %p116 = scmp.lt.s32.totalorder %s15, 2
      // Predicated region
      $region17: #{tpu_custom_call.1} parent=5 // pred_check
        %p117 = pneg %p116
      $region18: #{tpu_custom_call.1} parent=5 // pred_check_branch
        %119 = sbr.rel (%p117) target = $region20
      $region19: #{tpu_custom_call.1} parent=5 // pred_region
        // Predicated region
        $region21: #{tpu_custom_call.1} parent=19 // pred_check
          %p120 = pneg %p35
        $region22: #{tpu_custom_call.1} parent=19 // pred_check_branch
          %122 = sbr.rel (%p120) target = $region24
        $region23: #{tpu_custom_call.1} parent=19 // pred_region
          %s123 = sand.u32 %s25, 1
          %s124 = scalar_lea.sflag [#allocation3], %s123
          %s125 = sand.u32 %s25, 1
          %s126 = smul.addr %s125, 8
          %s127 = scalar_lea.vmem [#allocation2], %s126
          %s129 = ssub.s32 128, 128
          %130 = vsyncadd %s124, %s129
          %s131 = smul.addr %s15, 128
          %s132 = scalar_lea.hbm %s0, %s131
          %s134 = sshll.u32 %s127, 4
          %s135 = int_to_ptr.vmem [resolvable:$true] %s134
          %137 = dma.hbm_to_vmem [thread:$0]  %s132, 128, %s135, %s124
        $region24: #{tpu_custom_call.1} parent=19 // pred_fallthru
          _
      $region20: #{tpu_custom_call.1} parent=5 // pred_fallthru
        _
      %p138 = scmp.le.s32.totalorder 1, %s15
      %p139 = scmp.lt.s32.totalorder %s15, 3
      %p140 = pnand %p138, %p139
      %p141 = pneg %p140
      // Predicated region
      $region25: #{tpu_custom_call.1} parent=5 // pred_check
        _
      $region26: #{tpu_custom_call.1} parent=5 // pred_check_branch
        %143 = sbr.rel (%p140) target = $region28
      $region27: #{tpu_custom_call.1} parent=5 // pred_region
        %s144 = ssub.s32 %s15, 1
        %s145 = sand.u32 %s28, 1
        %s146 = scalar_lea.sflag [#allocation3], %s145
        %s147 = sand.u32 %s28, 1
        %s148 = smul.addr %s147, 8
        %s149 = scalar_lea.vmem [#allocation2], %s148
        // Predicated region
        $region29: #{tpu_custom_call.1} parent=27 // pred_check
          %p150 = pneg %p41
        $region30: #{tpu_custom_call.1} parent=27 // pred_check_branch
          %152 = sbr.rel (%p150) target = $region32
        $region31: #{tpu_custom_call.1} parent=27 // pred_region
          %153 = dma.done %s146, 128
        $region32: #{tpu_custom_call.1} parent=27 // pred_fallthru
          _
        // Predicated region
        $region33: #{tpu_custom_call.1} parent=27 // pred_check
          %p154 = pneg %p62
        $region34: #{tpu_custom_call.1} parent=27 // pred_check_branch
          %156 = sbr.rel (%p154) target = $region36
        $region35: #{tpu_custom_call.1} parent=27 // pred_region
          %157 = dma.done [#allocation6], 2048
        $region36: #{tpu_custom_call.1} parent=27 // pred_fallthru
          _
        %s158 = sand.u32 %s28, 1
        %s159 = scalar_lea.sflag [#allocation3], %s158
        %s160 = sand.u32 %s28, 1
        %s161 = smul.addr %s160, 8
        %s162 = scalar_lea.vmem [#allocation2], %s161
        %p163 = pneg %p41
        %p164 = pneg %p38
        %p165 = pneg %p62
        %p166 = pneg %p59
        %p167 = pneg %p88
        %p168 = pneg %p85
        %s169 = sand.u32 %s75, 1
        %s170 = scalar_lea.sflag [#allocation4], %s169
        %s171 = sand.u32 %s75, 1
        %s172 = smul.addr %s171, 8
        %s173 = scalar_lea.vmem [#allocation7], %s172
        %v174 = vld [vmem:[%s149] sm:$0xff]
        %v175 = vld [vmem:[#allocation5] sm:$0xff]
        %v176 = vld [vmem:[#allocation5 + $0x8] sm:$0xff]
        %v177 = vld [vmem:[#allocation5 + $0x10] sm:$0xff]
        %v178 = vld [vmem:[#allocation5 + $0x18] sm:$0xff]
        %v179 = vld [vmem:[#allocation5 + $0x20] sm:$0xff]
        %v180 = vld [vmem:[#allocation5 + $0x28] sm:$0xff]
        %v181 = vld [vmem:[#allocation5 + $0x30] sm:$0xff]
        %v182 = vld [vmem:[#allocation5 + $0x38] sm:$0xff]
        %v183 = vld [vmem:[#allocation5 + $0x40] sm:$0xff]
        %v184 = vld [vmem:[#allocation5 + $0x48] sm:$0xff]
        %v185 = vld [vmem:[#allocation5 + $0x50] sm:$0xff]
        %v186 = vld [vmem:[#allocation5 + $0x58] sm:$0xff]
        %v187 = vld [vmem:[#allocation5 + $0x60] sm:$0xff]
        %v188 = vld [vmem:[#allocation5 + $0x68] sm:$0xff]
        %v189 = vld [vmem:[#allocation5 + $0x70] sm:$0xff]
        %v190 = vld [vmem:[#allocation5 + $0x78] sm:$0xff]
        %191 = vmatprep.subr.mxu0 0.0
        %192 = vmatpush1.msra.mxu0 %v190
        %193 = vmatprep.subr.mxu0 0.0
        %194 = vmatpush1.msra.mxu0 %v189
        %195 = vmatprep.subr.mxu0 0.0
        %196 = vmatpush1.msra.mxu0 %v188
        %197 = vmatprep.subr.mxu0 0.0
        %198 = vmatpush1.msra.mxu0 %v187
        %199 = vmatprep.subr.mxu0 0.0
        %200 = vmatpush1.msra.mxu0 %v186
        %201 = vmatprep.subr.mxu0 0.0
        %202 = vmatpush1.msra.mxu0 %v185
        %203 = vmatprep.subr.mxu0 0.0
        %204 = vmatpush1.msra.mxu0 %v184
        %205 = vmatprep.subr.mxu0 0.0
        %206 = vmatpush1.msra.mxu0 %v183
        %207 = vmatprep.subr.mxu0 0.0
        %208 = vmatpush1.msra.mxu0 %v182
        %209 = vmatprep.subr.mxu0 0.0
        %210 = vmatpush1.msra.mxu0 %v181
        %211 = vmatprep.subr.mxu0 0.0
        %212 = vmatpush1.msra.mxu0 %v180
        %213 = vmatprep.subr.mxu0 0.0
        %214 = vmatpush1.msra.mxu0 %v179
        %215 = vmatprep.subr.mxu0 0.0
        %216 = vmatpush1.msra.mxu0 %v178
        %217 = vmatprep.subr.mxu0 0.0
        %218 = vmatpush1.msra.mxu0 %v177
        %219 = vmatprep.subr.mxu0 0.0
        %220 = vmatpush1.msra.mxu0 %v176
        %221 = vmatprep.subr.mxu0 0.0
        %222 = vmatpush1.msra.mxu0 %v175
        %223 = vmatprep.subr.mxu0 0.0
        %224 = vmatpush2.msra.mxu0 0.0
        %225 = vmatprep.subr.mxu0 0.0
        %226 = vmatpush2.msra.mxu0 0.0
        %227 = vmatprep.subr.mxu0 0.0
        %228 = vmatpush2.msra.mxu0 0.0
        %229 = vmatprep.subr.mxu0 0.0
        %230 = vmatpush2.msra.mxu0 0.0
        %231 = vmatprep.subr.mxu0 0.0
        %232 = vmatpush2.msra.mxu0 0.0
        %233 = vmatprep.subr.mxu0 0.0
        %234 = vmatpush2.msra.mxu0 0.0
        %235 = vmatprep.subr.mxu0 0.0
        %236 = vmatpush2.msra.mxu0 0.0
        %237 = vmatprep.subr.mxu0 0.0
        %238 = vmatpush2.msra.mxu0 0.0
        %239 = vmatprep.subr.mxu0 0.0
        %240 = vmatpush2.msra.mxu0 0.0
        %241 = vmatprep.subr.mxu0 0.0
        %242 = vmatpush2.msra.mxu0 0.0
        %243 = vmatprep.subr.mxu0 0.0
        %244 = vmatpush2.msra.mxu0 0.0
        %245 = vmatprep.subr.mxu0 0.0
        %246 = vmatpush2.msra.mxu0 0.0
        %247 = vmatprep.subr.mxu0 0.0
        %248 = vmatpush2.msra.mxu0 0.0
        %249 = vmatprep.subr.mxu0 0.0
        %250 = vmatpush2.msra.mxu0 0.0
        %251 = vmatprep.subr.mxu0 0.0
        %252 = vmatpush2.msra.mxu0 0.0
        %253 = vmatprep.subr.mxu0 0.0
        %254 = vmatpush2.msra.mxu0 0.0
        %255 = vmatprep.mubr.f32.mxu0 0.0
        %256 = vmatmul.mubr.f32.gmra.mxu0 %v174
        %v257 = vpop.f32.mrf.mxu0
        %v258 = vadd.f32 0.0, %v257
        %v259 = vpop.f32.mrf.mxu0
        %260 = vdwg.mxu0
        %261 = vst [vmem:[%s173] sm:$0xff] %v258
        %s262 = sand.u32 %s75, 1
        %s263 = scalar_lea.sflag [#allocation4], %s262
        %s264 = sand.u32 %s75, 1
        %s265 = smul.addr %s264, 8
        %s266 = scalar_lea.vmem [#allocation7], %s265
        // Predicated region
        $region37: #{tpu_custom_call.1} parent=27 // pred_check
          %p267 = pneg %p85
        $region38: #{tpu_custom_call.1} parent=27 // pred_check_branch
          %269 = sbr.rel (%p267) target = $region40
        $region39: #{tpu_custom_call.1} parent=27 // pred_region
          %s271 = ssub.s32 128, 128
          %272 = vsyncadd %s263, %s271
          %s273 = smul.addr %s20, 128
          %s274 = scalar_lea.hbm %s2, %s273
          %s276 = sshll.u32 %s266, 4
          %s277 = int_to_ptr.vmem [resolvable:$true] %s276
          %279 = dma.vmem_to_hbm [thread:$0]  %s277, 128, %s274, %s263
        $region40: #{tpu_custom_call.1} parent=27 // pred_fallthru
          _
      $region28: #{tpu_custom_call.1} parent=5 // pred_fallthru
        _
      %p280 = scmp.le.s32.totalorder 2, %s15
      // Predicated region
      $region41: #{tpu_custom_call.1} parent=5 // pred_check
        %p281 = pneg %p280
      $region42: #{tpu_custom_call.1} parent=5 // pred_check_branch
        %283 = sbr.rel (%p281) target = $region44
      $region43: #{tpu_custom_call.1} parent=5 // pred_region
        %s284 = ssub.s32 %s15, 2
        // Predicated region
        $region45: #{tpu_custom_call.1} parent=43 // pred_check
          %p285 = pneg %p91
        $region46: #{tpu_custom_call.1} parent=43 // pred_check_branch
          %287 = sbr.rel (%p285) target = $region48
        $region47: #{tpu_custom_call.1} parent=43 // pred_region
          %s288 = sand.u32 %s76, 1
          %s289 = scalar_lea.sflag [#allocation4], %s288
          %s290 = sand.u32 %s76, 1
          %s291 = smul.addr %s290, 8
          %s292 = scalar_lea.vmem [#allocation7], %s291
          %293 = dma.done %s289, 128
        $region48: #{tpu_custom_call.1} parent=43 // pred_fallthru
          _
      $region44: #{tpu_custom_call.1} parent=5 // pred_fallthru
        _
    $region6: #{tpu_custom_call.1} parent=1 // loop_footer
      %s19 = sadd.s32 1, %s15
    $region7: #{tpu_custom_call.1} parent=1 // loop_footer_branch
      %14 = sbr.rel target = $region3
    $region8: #{tpu_custom_call.1} parent=1 // loop_exit
      _
    %294 = vsyncpa [#allocation3], 1
    %s295 = scalar_lea.sflag [#allocation3], 1
    %296 = vsyncpa %s295, 1
    %297 = vsyncpa [#allocation6], 1
    %298 = vsyncpa [#allocation4], 1
    %s299 = scalar_lea.sflag [#allocation4], 1
    %300 = vsyncpa %s299, 1

</llo_original>
